<compile_context>
chip_gen: v5e
topology: v5e:2x2
jax: 0.10.0
libtpu: 0.0.40
codegen_flags: <defaults>
</compile_context>

<pallas_src>
import functools

import jax
import jax.numpy as jnp
from jax.experimental import pallas as pl
from jax.experimental.pallas import tpu as pltpu

_LANE = 128
_SUBLANE_F32 = 8
_SUBLANE_BF16 = 16


def _round_up(x, m):
    return ((x + m - 1) // m) * m


def _device_info():
    """Returns (vmem_capacity_bytes, tensorcores sharing the Pallas grid).

    Conservative fallbacks (64 MiB / 1 core) if introspection fails.
    """
    vmem = 64 * 1024 * 1024
    n_cores = 1
    try:
        info = pltpu.get_tpu_info()
        vmem = int(getattr(info, "vmem_capacity_bytes", vmem))
    except Exception:
        pass
    try:
        kind = jax.devices()[0].device_kind.lower()
        # Chips where "parallel" grid axes shard across 2 TensorCores.
        if any(tag in kind for tag in ("v4", "v5p", "v7")):
            n_cores = 2
    except Exception:
        pass
    return vmem, n_cores


def _select_nk_tiles(N, K, vmem_bytes, n_cores):
    big_vmem = vmem_bytes >= 100 * 1024 * 1024  # v5e/v6e: 128 MiB; v7x: 64 MiB
    cap_n = 2048 if big_vmem else 1024
    cap_k = 1024 if big_vmem else 512
    tile_n = min(_round_up(N, _LANE), cap_n)
    tile_k = min(_round_up(K, _LANE), cap_k)
    # Megacore (2 TCs): split the lane-dim N so each core streams half the
    # weight; splitting M would make both cores stream ALL of it.
    if n_cores >= 2 and _round_up(N, tile_n) // tile_n < 2 and tile_n > _LANE:
        tile_n = max(_LANE, _round_up(pl.cdiv(_round_up(N, _LANE), 2), _LANE))
    return tile_n, tile_k


def _linear_block_kernel(x_ref, w_ref, b_ref, o_ref, *, apply_relu):
    # x_ref: (tm, tk) bf16, w_ref: (tk, tn) bf16 [weight already (K, N)],
    # b_ref: (1, tn) f32, o_ref: (tm, tn) f32 -- o_ref doubles as the
    # accumulator since its index map ignores k (resident across the k axis).
    k = pl.program_id(2)

    @pl.when(k == 0)
    def _():
        o_ref[...] = jnp.zeros_like(o_ref)

    # MXU matmul with f32 accumulation; contraction dim is the last dim of x
    # and the FIRST dim of w (no transpose / relayout in the kernel).
    o_ref[...] += jnp.dot(
        x_ref[...], w_ref[...], preferred_element_type=jnp.float32
    )

    @pl.when(k == pl.num_programs(2) - 1)
    def _():
        y = o_ref[...] + b_ref[...]  # broadcast (1, tn) over rows
        if apply_relu:
            y = jnp.maximum(y, 0.0)
        o_ref[...] = y


def prepare_linear_params(w, b, *, tile_n, tile_k, compute_dtype=jnp.bfloat16):
    """One-time parameter prep (do at init, NOT per forward): transpose the
    nn.Linear (N, K) weight to (K, N), pad to the tile grid, cast to the MXU
    compute dtype.  Bias stays f32 (applied in the f32 epilogue)."""
    N, K = w.shape
    k_pad = _round_up(K, tile_k)
    n_pad = _round_up(N, tile_n)
    w_p = jnp.pad(jnp.transpose(w), ((0, k_pad - K), (0, n_pad - N)))
    w_p = w_p.astype(compute_dtype)
    if b is None:
        b = jnp.zeros((N,), jnp.float32)
    b_p = jnp.pad(b.astype(jnp.float32).reshape(1, N), ((0, 0), (0, n_pad - N)))
    # TODO(synk): on v7x, an fp8 weight path (per-output-channel scales applied
    # in the f32 epilogue) would halve weight HBM traffic again vs bf16.
    return w_p, b_p


def make_linear_block(w, b=None, *, act=None, compute_dtype=jnp.bfloat16):
    """Returns fn(x) computing act(x @ w.T + b) via a Pallas TPU matmul.

    w: (output_size, input_size) in nn.Linear layout, b: (output_size,) or
    None, act: None or "relu".
    """
    N, K = w.shape
    vmem_bytes, n_cores = _device_info()
    tile_n, tile_k = _select_nk_tiles(N, K, vmem_bytes, n_cores)
    w_p, b_p = prepare_linear_params(
        w, b, tile_n=tile_n, tile_k=tile_k, compute_dtype=compute_dtype
    )
    k_pad, n_pad = w_p.shape

    vmem_limit = min(
        96 * 1024 * 1024 if vmem_bytes >= 100 * 1024 * 1024 else 48 * 1024 * 1024,
        vmem_bytes,
    )
    sub = _SUBLANE_BF16 if compute_dtype == jnp.bfloat16 else _SUBLANE_F32
    kernel = functools.partial(_linear_block_kernel, apply_relu=(act == "relu"))

    def forward(x):
        B, Kx = x.shape
        assert Kx == K, "weight/input size mismatch"
        tile_m = min(_round_up(B, sub), 256)
        m_pad = _round_up(B, tile_m)
        # Per-call prep is only the activation pad + cast (weight prep hoisted).
        x_p = jnp.pad(x, ((0, m_pad - B), (0, k_pad - Kx))).astype(compute_dtype)

        grid = (m_pad // tile_m, n_pad // tile_n, k_pad // tile_k)
        itemsize = jnp.dtype(compute_dtype).itemsize
        cost = pl.CostEstimate(
            flops=2 * m_pad * n_pad * k_pad,
            transcendentals=0,
            bytes_accessed=(
                m_pad * k_pad * itemsize        # x
                + k_pad * n_pad * itemsize      # w
                + n_pad * 4                     # bias
                + m_pad * n_pad * 4             # out
            ),
        )

        # TODO(synk): if DMA is exposed at tiny tile_m, pl.Buffered(3) on the
        # weight BlockSpec (pipeline_mode=) can hide DMA jitter for a few %.
        out_padded = pl.pallas_call(
            kernel,
            out_shape=jax.ShapeDtypeStruct((m_pad, n_pad), jnp.float32),
            grid=grid,
            in_specs=[
                pl.BlockSpec((tile_m, tile_k), lambda i, j, k: (i, k)),  # x
                pl.BlockSpec((tile_k, tile_n), lambda i, j, k: (k, j)),  # w
                pl.BlockSpec((1, tile_n), lambda i, j, k: (0, j)),       # bias
            ],
            out_specs=pl.BlockSpec((tile_m, tile_n), lambda i, j, k: (i, j)),
            compiler_params=pltpu.CompilerParams(
                dimension_semantics=("parallel", "parallel", "arbitrary"),
                vmem_limit_bytes=vmem_limit,
            ),
            cost_estimate=cost,
        )(x_p, w_p, b_p)

        return out_padded[:B, :N].astype(x.dtype)

    return forward


def linear_block(x, w, b=None, *, act=None):
    """One-shot convenience wrapper (prep + call).  Prefer make_linear_block
    when the same weights are reused across many forward passes."""
    return make_linear_block(w, b, act=act)(x)


def linear_block_ref(x, w, b, *, act=None):
    # bf16-consistent reference: the kernel computes bf16 x bf16 -> f32 on the
    # MXU, which matches an f32 matmul of bf16-cast inputs.
    xb = x.astype(jnp.bfloat16).astype(jnp.float32)
    wb = w.astype(jnp.bfloat16).astype(jnp.float32)
    y = jnp.dot(xb, wb.T, precision=jax.lax.Precision.HIGHEST) + b
    if act == "relu":
        y = jnp.maximum(y, 0.0)
    return y


if __name__ == "__main__":
    key = jax.random.PRNGKey(0)
    kx, kw, kb = jax.random.split(key, 3)

    batch = 8
    input_size = 32
    output_size = 64

    x = jax.random.normal(kx, (batch, input_size), dtype=jnp.float32)
    # Deterministic synthetic params (mimics nn.Linear's uniform init range).
    bound = 1.0 / (input_size ** 0.5)
    w = jax.random.uniform(kw, (output_size, input_size), jnp.float32, -bound, bound)
    b = jax.random.uniform(kb, (output_size,), jnp.float32, -bound, bound)

    # act=None by default in LinearBlock; also exercise the "relu" act path.
    fwd_none = make_linear_block(w, b, act=None)
    fwd_relu = make_linear_block(w, b, act="relu")

    y_none = jax.block_until_ready(fwd_none(x))
    y_relu = jax.block_until_ready(fwd_relu(x))

    assert y_none.shape == (batch, output_size)
    assert jnp.allclose(y_none, linear_block_ref(x, w, b, act=None),
                        atol=2e-2, rtol=2e-2)
    assert jnp.allclose(y_relu, linear_block_ref(x, w, b, act="relu"),
                        atol=2e-2, rtol=2e-2)

    # Non-divisible / larger shapes validate padding + tiling (incl. megacore N-split).
    x2 = jax.random.normal(kx, (37, 200), dtype=jnp.float32)
    w2 = jax.random.uniform(kw, (300, 200), jnp.float32, -bound, bound)
    b2 = jax.random.uniform(kb, (300,), jnp.float32, -bound, bound)
    y2 = jax.block_until_ready(linear_block(x2, w2, b2, act="relu"))
    assert jnp.allclose(y2, linear_block_ref(x2, w2, b2, act="relu"),
                        atol=2e-2, rtol=2e-2)

    print("KERNEL_OK")
</pallas_src>

<mosaic_0001>
module attributes {stable_mosaic.version = 11 : i64} {
  func.func @_linear_block_kernel(%arg0: i32, %arg1: i32, %arg2: i32, %arg3: memref<16x128xbf16, #tpu.memory_space<vmem>>, %arg4: memref<128x128xbf16, #tpu.memory_space<vmem>>, %arg5: memref<1x128xf32, #tpu.memory_space<vmem>>, %arg6: memref<16x128xf32, #tpu.memory_space<vmem>>) attributes {dimension_semantics = [#tpu.dimension_semantics<parallel>, #tpu.dimension_semantics<parallel>, #tpu.dimension_semantics<arbitrary>], iteration_bounds = array<i64: 1, 1, 1>, scalar_prefetch = 0 : i64, scratch_operands = 0 : i64, tpu.core_type = #tpu.core_type<tc>, window_params = [{transform_indices = @transform_0, window_bounds = array<i64: 16, 128>}, {transform_indices = @transform_1, window_bounds = array<i64: 128, 128>}, {transform_indices = @transform_2, window_bounds = array<i64: 1, 128>}, {transform_indices = @transform_3, window_bounds = array<i64: 16, 128>}]} {
    %c0_i32 = arith.constant 0 : i32
    %0 = arith.cmpi eq, %arg2, %c0_i32 : i32
    %1 = arith.extui %0 : i1 to i32
    %c0_i32_0 = arith.constant 0 : i32
    %2 = arith.cmpi ne, %1, %c0_i32_0 : i32
    scf.if %2 {
      %cst_10 = arith.constant 0.000000e+00 : f32
      %12 = vector.broadcast %cst_10 : f32 to vector<16x128xf32>
      %c0_11 = arith.constant 0 : index
      %c0_12 = arith.constant 0 : index
      %13 = vector.load %arg6[%c0_11, %c0_12] : memref<16x128xf32, #tpu.memory_space<vmem>>, vector<16x128xf32>
      tpu.vector_store %arg6[%c0_11, %c0_12], %12 {strides = array<i32>} : memref<16x128xf32, #tpu.memory_space<vmem>>, vector<16x128xf32>,
    } else {
    }
    %c0 = arith.constant 0 : index
    %c0_1 = arith.constant 0 : index
    %3 = vector.load %arg6[%c0, %c0_1] : memref<16x128xf32, #tpu.memory_space<vmem>>, vector<16x128xf32>
    %c0_2 = arith.constant 0 : index
    %c0_3 = arith.constant 0 : index
    %4 = vector.load %arg3[%c0_2, %c0_3] : memref<16x128xbf16, #tpu.memory_space<vmem>>, vector<16x128xbf16>
    %c0_4 = arith.constant 0 : index
    %c0_5 = arith.constant 0 : index
    %5 = vector.load %arg4[%c0_4, %c0_5] : memref<128x128xbf16, #tpu.memory_space<vmem>>, vector<128x128xbf16>
    %cst = arith.constant dense<0.000000e+00> : vector<16x128xf32>
    %6 = tpu.matmul %4, %5, %cst {dimension_numbers = #tpu.dot_dimension_numbers<[1], [0], [0], [1], [0, 0, 1, 1], [], []>} : vector<16x128xbf16>, vector<128x128xbf16>, vector<16x128xf32> -> vector<16x128xf32>
    %7 = arith.addf %3, %6 : vector<16x128xf32>
    %c0_6 = arith.constant 0 : index
    %c0_7 = arith.constant 0 : index
    %8 = vector.load %arg6[%c0_6, %c0_7] : memref<16x128xf32, #tpu.memory_space<vmem>>, vector<16x128xf32>
    tpu.vector_store %arg6[%c0_6, %c0_7], %7 {strides = array<i32>} : memref<16x128xf32, #tpu.memory_space<vmem>>, vector<16x128xf32>,
    %c0_i32_8 = arith.constant 0 : i32
    %9 = arith.cmpi eq, %arg2, %c0_i32_8 : i32
    %10 = arith.extui %9 : i1 to i32
    %c0_i32_9 = arith.constant 0 : i32
    %11 = arith.cmpi ne, %10, %c0_i32_9 : i32
    scf.if %11 {
      %c0_10 = arith.constant 0 : index
      %c0_11 = arith.constant 0 : index
      %12 = vector.load %arg6[%c0_10, %c0_11] : memref<16x128xf32, #tpu.memory_space<vmem>>, vector<16x128xf32>
      %c0_12 = arith.constant 0 : index
      %c0_13 = arith.constant 0 : index
      %13 = vector.load %arg5[%c0_12, %c0_13] : memref<1x128xf32, #tpu.memory_space<vmem>>, vector<1x128xf32>
      %14 = vector.broadcast %13 : vector<1x128xf32> to vector<16x128xf32>
      %15 = arith.addf %12, %14 : vector<16x128xf32>
      %c0_14 = arith.constant 0 : index
      %c0_15 = arith.constant 0 : index
      %16 = vector.load %arg6[%c0_14, %c0_15] : memref<16x128xf32, #tpu.memory_space<vmem>>, vector<16x128xf32>
      tpu.vector_store %arg6[%c0_14, %c0_15], %15 {strides = array<i32>} : memref<16x128xf32, #tpu.memory_space<vmem>>, vector<16x128xf32>,
    } else {
    }
    return
  }
  func.func @transform_0(%arg0: i32, %arg1: i32, %arg2: i32) -> (i32, i32) {
    %c0_i32 = arith.constant 0 : i32
    return %arg0, %arg2 : i32, i32
  }
  func.func @transform_1(%arg0: i32, %arg1: i32, %arg2: i32) -> (i32, i32) {
    %c0_i32 = arith.constant 0 : i32
    return %arg2, %arg1 : i32, i32
  }
  func.func @transform_2(%arg0: i32, %arg1: i32, %arg2: i32) -> (i32, i32) {
    %c0_i32 = arith.constant 0 : i32
    %c0_i32_0 = arith.constant 0 : i32
    return %c0_i32, %arg1 : i32, i32
  }
  func.func @transform_3(%arg0: i32, %arg1: i32, %arg2: i32) -> (i32, i32) {
    %c0_i32 = arith.constant 0 : i32
    return %arg0, %arg1 : i32, i32
  }
}

</mosaic_0001>

<llo_original>
// kernel: tpu_custom_call.1
$region0: #{tpu_custom_call.1}
  #allocation0 [shape = 'u32[]', space=smem, size = 0x4, offset = 0x4, fixed_abs, tag = 'smem constant byte address 0x4 - core index']
  #allocation1 [shape = 'u32[72,128]{1,0:T(1,128)}', space=vmem, size = 0x9000, scoped, tag = 'internal scratch']
  %s0 = inlined_call_operand.hbm [shape: bf16[16,128], index: 0, kind: input, shape index: {}]
  %s1 = inlined_call_operand.hbm [shape: bf16[128,128], index: 1, kind: input, shape index: {}]
  %s2 = inlined_call_operand.vmem [shape: f32[1,128], index: 2, kind: input, shape index: {}]
  %s3 = inlined_call_operand.hbm [shape: f32[16,128], index: 3, kind: output, shape index: {}]
  %s4 = sld [smem:[#allocation0]]
  $region38: #{tpu_custom_call.1} parent=0
    _
  %s6 = ssub.s32 1, %s4
  %s7 = scalar_select 0, %s6, %s4
  $region1: #{tpu_custom_call.1} parent=0
    #allocation2 [shape = 'u8[4096]{0}', space=vmem, size = 0x1000, scoped, tag = 'input window, operand 0, single buffered']
    #allocation3 [shape = 's32[1]{0}', space=sflag, size = 0x4, scoped, tag = 'scoped memory for tpu_custom_call.1']
    #allocation4 [shape = 's32[1]{0}', space=sflag, size = 0x4, scoped, tag = 'scoped memory for tpu_custom_call.1']
    #allocation5 [shape = 'u8[32768]{0}', space=vmem, size = 0x8000, scoped, tag = 'input window, operand 1, single buffered']
    #allocation6 [shape = 's32[1]{0}', space=sflag, size = 0x4, scoped, tag = 'scoped memory for tpu_custom_call.1']
    #allocation7 [shape = 'u8[8192]{0}', space=vmem, size = 0x2000, scoped, tag = 'output window, operand 0, single buffered']
    %8 = vsyncpa [#allocation3], 0
    %9 = vsyncpa [#allocation6], 0
    %10 = vsyncpa [#allocation4], 0
    // Predicated region
    $region2: #{tpu_custom_call.1} parent=1 // pred_check
      _
    $region3: #{tpu_custom_call.1} parent=1 // pred_check_branch
      %12 = sbr.rel (0) target = $region5
    $region4: #{tpu_custom_call.1} parent=1 // pred_region
      %14 = vsyncadd [#allocation3], 0
      %s15 = sshll.u32 %s0, 4
      %s16 = int_to_ptr.hbm [resolvable:$true] %s15
      %s17 = sshll.u32 [#allocation2], 4
      %s18 = int_to_ptr.vmem [resolvable:$true] %s17
      %23 = dma.hbm_to_vmem [thread:$0]  %s16, 128, %s18, [#allocation3], 64, 64, 4
    $region5: #{tpu_custom_call.1} parent=1 // pred_fallthru
      _
    // Predicated region
    $region6: #{tpu_custom_call.1} parent=1 // pred_check
      _
    $region7: #{tpu_custom_call.1} parent=1 // pred_check_branch
      %25 = sbr.rel (0) target = $region9
    $region8: #{tpu_custom_call.1} parent=1 // pred_region
      %27 = vsyncadd [#allocation6], 0
      %s28 = sshll.u32 %s1, 4
      %s29 = int_to_ptr.hbm [resolvable:$true] %s28
      %s30 = sshll.u32 [#allocation5], 4
      %s31 = int_to_ptr.vmem [resolvable:$true] %s30
      %36 = dma.hbm_to_vmem [thread:$0]  %s29, 1024, %s31, [#allocation6], 64, 64, 4
    $region9: #{tpu_custom_call.1} parent=1 // pred_fallthru
      _
    // Predicated region
    $region10: #{tpu_custom_call.1} parent=1 // pred_check
      _
    $region11: #{tpu_custom_call.1} parent=1 // pred_check_branch
      %38 = sbr.rel (0) target = $region13
    $region12: #{tpu_custom_call.1} parent=1 // pred_region
      _
    $region13: #{tpu_custom_call.1} parent=1 // pred_fallthru
      _
    // Predicated region
    $region14: #{tpu_custom_call.1} parent=1 // pred_check
      _
    $region15: #{tpu_custom_call.1} parent=1 // pred_check_branch
      %40 = sbr.rel (0) target = $region17
    $region16: #{tpu_custom_call.1} parent=1 // pred_region
      %42 = dma.done [#allocation3], 128
    $region17: #{tpu_custom_call.1} parent=1 // pred_fallthru
      _
    // Predicated region
    $region18: #{tpu_custom_call.1} parent=1 // pred_check
      _
    $region19: #{tpu_custom_call.1} parent=1 // pred_check_branch
      %44 = sbr.rel (0) target = $region21
    $region20: #{tpu_custom_call.1} parent=1 // pred_region
      %46 = dma.done [#allocation6], 1024
    $region21: #{tpu_custom_call.1} parent=1 // pred_fallthru
      _
    %p47 = scmp.eq.s32.totalorder 0, 0
    // Predicated region
    $region22: #{tpu_custom_call.1} parent=1 // pred_check
      %p48 = pneg %p47
    $region23: #{tpu_custom_call.1} parent=1 // pred_check_branch
      %50 = sbr.rel (%p48) target = $region25
    $region24: #{tpu_custom_call.1} parent=1 // pred_region
      %51 = vst [vmem:[#allocation7] sm:$0xff] 0.0
      %52 = vst [vmem:[#allocation7 + $0x8] sm:$0xff] 0.0
    $region25: #{tpu_custom_call.1} parent=1 // pred_fallthru
      _
    %v53 = vld [vmem:[#allocation7] sm:$0xff]
    %v54 = vld [vmem:[#allocation7 + $0x8] sm:$0xff]
    %v55 = vld [vmem:[#allocation2] sm:$0xf]
    %v56 = vld [vmem:[#allocation2 + $0x4] sm:$0xf]
    %v57 = vld [vmem:[#allocation5] sm:$0xf]
    %v58 = vld [vmem:[#allocation5 + $0x4] sm:$0xf]
    %v59 = vld [vmem:[#allocation5 + $0x8] sm:$0xf]
    %v60 = vld [vmem:[#allocation5 + $0xc] sm:$0xf]
    %v61 = vld [vmem:[#allocation5 + $0x10] sm:$0xf]
    %v62 = vld [vmem:[#allocation5 + $0x14] sm:$0xf]
    %v63 = vld [vmem:[#allocation5 + $0x18] sm:$0xf]
    %v64 = vld [vmem:[#allocation5 + $0x1c] sm:$0xf]
    %v65 = vld [vmem:[#allocation5 + $0x20] sm:$0xf]
    %v66 = vld [vmem:[#allocation5 + $0x24] sm:$0xf]
    %v67 = vld [vmem:[#allocation5 + $0x28] sm:$0xf]
    %v68 = vld [vmem:[#allocation5 + $0x2c] sm:$0xf]
    %v69 = vld [vmem:[#allocation5 + $0x30] sm:$0xf]
    %v70 = vld [vmem:[#allocation5 + $0x34] sm:$0xf]
    %v71 = vld [vmem:[#allocation5 + $0x38] sm:$0xf]
    %v72 = vld [vmem:[#allocation5 + $0x3c] sm:$0xf]
    %v75 = vunpack.c.l.b16 %v55
    %v76 = vunpack.c.l.b16 %v56
    %v77 = vpack.c.b16 %v76, %v75
    %v95 = vunpack.c.l.b16 %v57
    %v96 = vunpack.c.l.b16 %v58
    %v97 = vunpack.c.l.b16 %v59
    %v98 = vunpack.c.l.b16 %v60
    %v99 = vunpack.c.l.b16 %v61
    %v100 = vunpack.c.l.b16 %v62
    %v101 = vunpack.c.l.b16 %v63
    %v102 = vunpack.c.l.b16 %v64
    %v103 = vunpack.c.l.b16 %v65
    %v104 = vunpack.c.l.b16 %v66
    %v105 = vunpack.c.l.b16 %v67
    %v106 = vunpack.c.l.b16 %v68
    %v107 = vunpack.c.l.b16 %v69
    %v108 = vunpack.c.l.b16 %v70
    %v109 = vunpack.c.l.b16 %v71
    %v110 = vunpack.c.l.b16 %v72
    %v111 = vpack.c.b16 %v96, %v95
    %v112 = vpack.c.b16 %v98, %v97
    %v113 = vpack.c.b16 %v100, %v99
    %v114 = vpack.c.b16 %v102, %v101
    %v115 = vpack.c.b16 %v104, %v103
    %v116 = vpack.c.b16 %v106, %v105
    %v117 = vpack.c.b16 %v108, %v107
    %v118 = vpack.c.b16 %v110, %v109
    %127 = vmatpush.bf16.msra.mxu0 %v118
    %128 = vmatpush.bf16.msra.mxu0 %v117
    %129 = vmatpush.bf16.msra.mxu0 %v116
    %130 = vmatpush.bf16.msra.mxu0 %v115
    %131 = vmatpush.bf16.msra.mxu0 %v114
    %132 = vmatpush.bf16.msra.mxu0 %v113
    %133 = vmatpush.bf16.msra.mxu0 %v112
    %134 = vmatpush.bf16.msra.mxu0 %v111
    %135 = vmatmul.bf16.gmra.mxu0 %v77
    %v136 = vpop.f32.mrf.mxu0
    %v137 = vadd.f32 0.0, %v136
    %v138 = vpop.f32.mrf.mxu0
    %v139 = vadd.f32 0.0, %v138
    %140 = vdwg.mxu0
    %v141 = vadd.f32 %v53, %v137
    %v142 = vadd.f32 %v54, %v139
    %143 = vst [vmem:[#allocation7] sm:$0xff] %v141
    %144 = vst [vmem:[#allocation7 + $0x8] sm:$0xff] %v142
    // Predicated region
    $region26: #{tpu_custom_call.1} parent=1 // pred_check
      %p145 = pneg %p47
    $region27: #{tpu_custom_call.1} parent=1 // pred_check_branch
      %147 = sbr.rel (%p145) target = $region29
    $region28: #{tpu_custom_call.1} parent=1 // pred_region
      %v148 = vld [vmem:[#allocation7] sm:$0xff]
      %v149 = vld [vmem:[#allocation7 + $0x8] sm:$0xff]
      %v150 = vld [vmem:[%s2] sm:$0x1]
      %v152 = vperm.slane %v150, 0
      %v154 = vadd.f32 %v148, %v152
      %v155 = vadd.f32 %v149, %v152
      %156 = vst [vmem:[#allocation7] sm:$0xff] %v154
      %157 = vst [vmem:[#allocation7 + $0x8] sm:$0xff] %v155
    $region29: #{tpu_custom_call.1} parent=1 // pred_fallthru
      _
    // Predicated region
    $region30: #{tpu_custom_call.1} parent=1 // pred_check
      _
    $region31: #{tpu_custom_call.1} parent=1 // pred_check_branch
      %159 = sbr.rel (0) target = $region33
    $region32: #{tpu_custom_call.1} parent=1 // pred_region
      %161 = vsyncadd [#allocation4], 0
      %s162 = sshll.u32 [#allocation7], 4
      %s163 = int_to_ptr.vmem [resolvable:$true] %s162
      %s164 = sshll.u32 %s3, 4
      %s165 = int_to_ptr.hbm [resolvable:$true] %s164
      %170 = dma.vmem_to_hbm [thread:$0]  %s163, 256, %s165, [#allocation4], 128, 128, 8
    $region33: #{tpu_custom_call.1} parent=1 // pred_fallthru
      _
    // Predicated region
    $region34: #{tpu_custom_call.1} parent=1 // pred_check
      _
    $region35: #{tpu_custom_call.1} parent=1 // pred_check_branch
      %172 = sbr.rel (0) target = $region37
    $region36: #{tpu_custom_call.1} parent=1 // pred_region
      %174 = dma.done [#allocation4], 256
    $region37: #{tpu_custom_call.1} parent=1 // pred_fallthru
      _
    %175 = vsyncpa [#allocation3], 1
    %176 = vsyncpa [#allocation6], 1
    %177 = vsyncpa [#allocation4], 1

</llo_original>
